<compile_context>
chip_gen: v6e
topology: v6e:2x2x1
jax: 0.10.0
libtpu: 0.0.40
codegen_flags: <defaults>
</compile_context>

<pallas_src>
import functools

import jax
import jax.numpy as jnp
from jax.experimental import pallas as pl
from jax.experimental.pallas import tpu as pltpu


def attention_kernel(z_ref, w_ref, out_ref, beta_ref):
    # z_ref:    (Bt, N, D)  input dtype (f32 or bf16)
    # w_ref:    (1, D)      shared projection weight (constant index_map -> resident)
    # out_ref:  (Bt, D)
    # beta_ref: (Bt, N)     lane-dense; reshaped to (B, N, 1) in the wrapper
    z = z_ref[...]                                        # native dtype, no full-tile cast
    w = w_ref[...].reshape(1, 1, -1).astype(z.dtype)      # (1, 1, D)

    # Projection: VPU multiply in the native dtype, lane (D) reduction
    # accumulated in f32.  Keeps N on the lane axis of `scores`
    # (no width-1 MXU matvec, no transpose).
    scores = jnp.sum(z * w, axis=-1, dtype=jnp.float32)   # (Bt, N) f32

    # Numerically-stable softmax over N (lane axis), all on small (Bt, N) f32.
    m = jnp.max(scores, axis=-1, keepdims=True)           # (Bt, 1)
    e = jnp.exp(scores - m)                               # (Bt, N)
    s = jnp.sum(e, axis=-1, keepdims=True)                # (Bt, 1)

    # Reciprocal on the EUP; one Newton step on a tiny (Bt, 1) tensor restores
    # full f32 accuracy while keeping the divide off the VALU slots.
    inv_s = pl.reciprocal(s, approx=True)
    inv_s = inv_s * (2.0 - s * inv_s)

    # beta computed once, reused for BOTH outputs.
    beta = e * inv_s                                       # (Bt, N) f32
    beta_ref[...] = beta.astype(beta_ref.dtype)

    # Weighted sum: the O(Bt*N*D) multiply stays in the input dtype
    # (bf16-native on v6e/v7x); the reduction over N accumulates in f32.
    bz = jnp.expand_dims(beta.astype(z.dtype), -1) * z     # (Bt, N, D)
    out_ref[...] = jnp.sum(bz, axis=1, dtype=jnp.float32).astype(out_ref.dtype)


def _vmem_limit_bytes():
    """Scoped-VMEM limit: ~75% of physical VMEM, capped at 100 MiB."""
    try:
        cap = int(pltpu.get_tpu_info().vmem_capacity_bytes)
    except Exception:
        cap = 64 * 1024 * 1024  # conservative fallback: v7x per-TC physical VMEM
    return min(int(cap * 0.75), 100 * 1024 * 1024)


def _choose_block_b(B, N, D, itemsize, tile_budget_bytes):
    """VMEM-budgeted batch-block size, rounded to a conforming value."""
    # Per-batch-row footprint (bytes):
    #   2x  double-buffered z input block
    #   2x  f32 in-kernel temporaries over (N, D) (product / converted reduce)
    #   2x  double-buffered out + beta output blocks
    per_row = (2 * N * D * itemsize
               + 2 * N * D * 4
               + 2 * (D + N) * itemsize)
    bb = max(1, tile_budget_bytes // per_row)
    if bb >= B:
        bb = B                            # whole batch in one block (full dim -> exempt)
    else:
        bb = max(8, (bb // 8) * 8)        # (8,128) rule on the second-to-last dim
        bb = min(bb, B)

    # Prefer >= 2 grid steps (megacore on v7x + pipeline overlap) whenever the
    # batch can be split into conforming multiple-of-8 blocks.
    if bb == B and B >= 16:
        half = max(8, ((B + 1) // 2 + 7) // 8 * 8)
        bb = min(bb, half)
    return int(bb)


def attention_forward(z, w_proj, *, block_b=None):
    """z: [B, N, D], w_proj: [1, D].  Returns (out [B, D], beta [B, N, 1])."""
    B, N, D = z.shape
    itemsize = jnp.dtype(z.dtype).itemsize

    vmem_limit = _vmem_limit_bytes()
    tile_budget = int(vmem_limit * 0.8)   # ~20% headroom inside the scoped limit

    if block_b is None:
        block_b = _choose_block_b(B, N, D, itemsize, tile_budget)
    else:
        # Guard user-supplied block_b: multiple of 8 (or the full batch).
        block_b = min(int(block_b), B)
        if block_b != B:
            block_b = max(8, (block_b // 8) * 8)
            block_b = min(block_b, B)

    grid_b = pl.cdiv(B, block_b)

    out, beta2d = pl.pallas_call(
        attention_kernel,
        out_shape=(
            jax.ShapeDtypeStruct((B, D), z.dtype),
            jax.ShapeDtypeStruct((B, N), z.dtype),   # lane-dense beta
        ),
        grid_spec=pltpu.PrefetchScalarGridSpec(
            num_scalar_prefetch=0,
            grid=(grid_b,),
            in_specs=[
                pl.BlockSpec((block_b, N, D), lambda i: (i, 0, 0)),  # z batch-block
                pl.BlockSpec((1, D), lambda i: (0, 0)),              # shared weight
            ],
            out_specs=[
                pl.BlockSpec((block_b, D), lambda i: (i, 0)),
                pl.BlockSpec((block_b, N), lambda i: (i, 0)),
            ],
        ),
        compiler_params=pltpu.CompilerParams(
            dimension_semantics=("parallel",),
            vmem_limit_bytes=vmem_limit,
        ),
    )(z, w_proj)

    # Layout plumbing (not compute): restore the PyTorch (B, N, 1) beta shape.
    return out, beta2d.reshape(B, N, 1)


def attention_reference(z, w_proj):
    # Pure-JAX reference reproducing the PyTorch forward exactly (in f32).
    z32 = z.astype(jnp.float32)
    w32 = w_proj.astype(jnp.float32)
    w = jnp.einsum("bnd,od->bno", z32, w32)           # (B, N, 1)
    beta = jax.nn.softmax(w, axis=1)                  # softmax over dim=1
    out = jnp.sum(beta * z32, axis=1)                 # (B, D)
    return out, beta


if __name__ == "__main__":
    key = jax.random.PRNGKey(0)
    k_z, k_w, k_z2 = jax.random.split(key, 3)

    # Small shapes consistent with the module: batch=2, seq=8, in_size=32.
    B, N, D = 2, 8, 32
    z = jax.random.normal(k_z, (B, N, D), dtype=jnp.float32)

    # Deterministic init mimicking nn.Linear(in_size, 1, bias=False): U(-1/sqrt(D), 1/sqrt(D))
    bound = 1.0 / (D ** 0.5)
    w_proj = jax.random.uniform(k_w, (1, D), dtype=jnp.float32,
                                minval=-bound, maxval=bound)

    out, beta = attention_forward(z, w_proj)
    out = jax.block_until_ready(out)
    beta = jax.block_until_ready(beta)

    out_ref, beta_ref = attention_reference(z, w_proj)
    assert out.shape == (B, D)
    assert beta.shape == (B, N, 1)
    assert jnp.allclose(out, out_ref, atol=1e-4, rtol=1e-4)
    assert jnp.allclose(beta, beta_ref, atol=1e-4, rtol=1e-4)

    # Second check: batch large enough to exercise >=2 grid steps and a
    # partial (masked) last block.
    B2 = 20
    z2 = jax.random.normal(k_z2, (B2, N, D), dtype=jnp.float32)
    out2, beta2 = attention_forward(z2, w_proj)
    out2 = jax.block_until_ready(out2)
    beta2 = jax.block_until_ready(beta2)
    out2_ref, beta2_ref = attention_reference(z2, w_proj)
    assert jnp.allclose(out2, out2_ref, atol=1e-4, rtol=1e-4)
    assert jnp.allclose(beta2, beta2_ref, atol=1e-4, rtol=1e-4)

    print("KERNEL_OK")
</pallas_src>

<mosaic_0001>
module attributes {stable_mosaic.version = 11 : i64} {
  func.func @attention_kernel(%arg0: i32, %arg1: memref<2x8x32xf32, #tpu.memory_space<vmem>>, %arg2: memref<1x32xf32, #tpu.memory_space<vmem>>, %arg3: memref<2x32xf32, #tpu.memory_space<vmem>>, %arg4: memref<2x8xf32, #tpu.memory_space<vmem>>) attributes {dimension_semantics = [#tpu.dimension_semantics<parallel>], iteration_bounds = array<i64: 1>, scalar_prefetch = 0 : i64, scratch_operands = 0 : i64, tpu.core_type = #tpu.core_type<tc>, window_params = [{transform_indices = @transform_0, window_bounds = array<i64: 2, 8, 32>}, {pipeline_mode = #tpu.pipeline_mode<synchronous>, transform_indices = @transform_1, window_bounds = array<i64: 1, 32>}, {transform_indices = @transform_2, window_bounds = array<i64: 2, 32>}, {transform_indices = @transform_3, window_bounds = array<i64: 2, 8>}]} {
    %c0 = arith.constant 0 : index
    %c0_0 = arith.constant 0 : index
    %c0_1 = arith.constant 0 : index
    %0 = vector.load %arg1[%c0, %c0_0, %c0_1] : memref<2x8x32xf32, #tpu.memory_space<vmem>>, vector<2x8x32xf32>
    %c0_2 = arith.constant 0 : index
    %c0_3 = arith.constant 0 : index
    %1 = vector.load %arg2[%c0_2, %c0_3] : memref<1x32xf32, #tpu.memory_space<vmem>>, vector<1x32xf32>
    %2 = vector.shape_cast %1 : vector<1x32xf32> to vector<1x1x32xf32>
    %3 = vector.broadcast %2 : vector<1x1x32xf32> to vector<2x8x32xf32>
    %4 = arith.mulf %0, %3 : vector<2x8x32xf32>
    %cst = arith.constant dense<0.000000e+00> : vector<2x8xf32>
    %5 = vector.multi_reduction <add>, %4, %cst [2] : vector<2x8x32xf32> to vector<2x8xf32>
    %cst_4 = arith.constant dense<0xFF800000> : vector<2xf32>
    %6 = vector.multi_reduction <maximumf>, %5, %cst_4 [1] : vector<2x8xf32> to vector<2xf32>
    %7 = vector.shape_cast %6 : vector<2xf32> to vector<2x1xf32>
    %8 = vector.broadcast %7 : vector<2x1xf32> to vector<2x8xf32>
    %9 = arith.subf %5, %8 : vector<2x8xf32>
    %10 = math.exp %9 : vector<2x8xf32>
    %cst_5 = arith.constant dense<0.000000e+00> : vector<2xf32>
    %11 = vector.multi_reduction <add>, %10, %cst_5 [1] : vector<2x8xf32> to vector<2xf32>
    %12 = vector.shape_cast %11 : vector<2xf32> to vector<2x1xf32>
    %13 = tpu.reciprocal %12 {approx = true} : vector<2x1xf32> -> vector<2x1xf32>
    %14 = arith.mulf %12, %13 : vector<2x1xf32>
    %cst_6 = arith.constant 2.000000e+00 : f32
    %15 = vector.broadcast %cst_6 : f32 to vector<2x1xf32>
    %16 = arith.subf %15, %14 : vector<2x1xf32>
    %17 = arith.mulf %13, %16 : vector<2x1xf32>
    %18 = vector.broadcast %17 : vector<2x1xf32> to vector<2x8xf32>
    %19 = arith.mulf %10, %18 : vector<2x8xf32>
    %c0_7 = arith.constant 0 : index
    %c0_8 = arith.constant 0 : index
    %20 = vector.load %arg4[%c0_7, %c0_8] : memref<2x8xf32, #tpu.memory_space<vmem>>, vector<2x8xf32>
    tpu.vector_store %arg4[%c0_7, %c0_8], %19 {strides = array<i32>} : memref<2x8xf32, #tpu.memory_space<vmem>>, vector<2x8xf32>,
    %21 = vector.shape_cast %19 : vector<2x8xf32> to vector<2x8x1xf32>
    %22 = vector.broadcast %21 : vector<2x8x1xf32> to vector<2x8x32xf32>
    %23 = arith.mulf %22, %0 : vector<2x8x32xf32>
    %cst_9 = arith.constant dense<0.000000e+00> : vector<2x32xf32>
    %24 = vector.multi_reduction <add>, %23, %cst_9 [1] : vector<2x8x32xf32> to vector<2x32xf32>
    %c0_10 = arith.constant 0 : index
    %c0_11 = arith.constant 0 : index
    %25 = vector.load %arg3[%c0_10, %c0_11] : memref<2x32xf32, #tpu.memory_space<vmem>>, vector<2x32xf32>
    tpu.vector_store %arg3[%c0_10, %c0_11], %24 {strides = array<i32>} : memref<2x32xf32, #tpu.memory_space<vmem>>, vector<2x32xf32>,
    return
  }
  func.func @transform_0(%arg0: i32) -> (i32, i32, i32) {
    %c0_i32 = arith.constant 0 : i32
    %c0_i32_0 = arith.constant 0 : i32
    %c0_i32_1 = arith.constant 0 : i32
    return %arg0, %c0_i32, %c0_i32_0 : i32, i32, i32
  }
  func.func @transform_1(%arg0: i32) -> (i32, i32) {
    %c0_i32 = arith.constant 0 : i32
    %c0_i32_0 = arith.constant 0 : i32
    %c0_i32_1 = arith.constant 0 : i32
    return %c0_i32, %c0_i32_0 : i32, i32
  }
  func.func @transform_2(%arg0: i32) -> (i32, i32) {
    %c0_i32 = arith.constant 0 : i32
    %c0_i32_0 = arith.constant 0 : i32
    return %arg0, %c0_i32 : i32, i32
  }
  func.func @transform_3(%arg0: i32) -> (i32, i32) {
    %c0_i32 = arith.constant 0 : i32
    %c0_i32_0 = arith.constant 0 : i32
    return %arg0, %c0_i32 : i32, i32
  }
}

</mosaic_0001>

<llo_original>
// kernel: tpu_custom_call.1
$region0: #{tpu_custom_call.1}
  #allocation0 [shape = 'u32[]', space=smem, size = 0x4, offset = 0x4, fixed_abs, tag = 'smem constant byte address 0x4 - core index']
  #allocation1 [shape = 'u32[144,128]{1,0:T(1,128)}', space=vmem, size = 0x12000, scoped, tag = 'internal scratch']
  %s0 = inlined_call_operand.hbm [shape: f32[2,8,32], index: 0, kind: input, shape index: {}]
  %s1 = inlined_call_operand.vmem [shape: f32[1,32], index: 1, kind: input, shape index: {}]
  %s2 = inlined_call_operand.hbm [shape: f32[2,32], index: 2, kind: output, shape index: {0}]
  %s3 = inlined_call_operand.hbm [shape: f32[2,8], index: 3, kind: output, shape index: {1}]
  %4 = xla_tuple %s2, %s3
  %s5 = sld [smem:[#allocation0]]
  $region30: #{tpu_custom_call.1} parent=0
    _
  %s7 = ssub.s32 1, %s5
  %s8 = scalar_select 0, %s7, %s5
  $region1: #{tpu_custom_call.1} parent=0
    #allocation2 [shape = 'u8[8192]{0}', space=vmem, size = 0x2000, scoped, tag = 'input window, operand 0, single buffered']
    #allocation3 [shape = 's32[1]{0}', space=sflag, size = 0x4, scoped, tag = 'scoped memory for tpu_custom_call.1']
    #allocation4 [shape = 's32[1]{0}', space=sflag, size = 0x4, scoped, tag = 'scoped memory for tpu_custom_call.1']
    #allocation5 [shape = 'u8[1024]{0}', space=vmem, size = 0x400, scoped, tag = 'output window, operand 0, single buffered']
    #allocation6 [shape = 'u8[1024]{0}', space=vmem, size = 0x400, scoped, tag = 'output window, operand 1, single buffered']
    #allocation7 [shape = 's32[1]{0}', space=sflag, size = 0x4, scoped, tag = 'scoped memory for tpu_custom_call.1']
    %9 = vsyncpa [#allocation3], 0
    %10 = vsyncpa [#allocation4], 0
    %11 = vsyncpa [#allocation7], 0
    // Predicated region
    $region2: #{tpu_custom_call.1} parent=1 // pred_check
      _
    $region3: #{tpu_custom_call.1} parent=1 // pred_check_branch
      %13 = sbr.rel (0) target = $region5
    $region4: #{tpu_custom_call.1} parent=1 // pred_region
      %s15 = ssub.s32 256, 256
      %16 = vsyncadd [#allocation3], %s15
      %s17 = sshll.u32 [#allocation2], 4
      %s18 = int_to_ptr.vmem [resolvable:$true] %s17
      %23 = dma.hbm_to_vmem [thread:$0]  %s0, 256, %s18, [#allocation3], 128, 128, 8
    $region5: #{tpu_custom_call.1} parent=1 // pred_fallthru
      _
    // Predicated region
    $region6: #{tpu_custom_call.1} parent=1 // pred_check
      _
    $region7: #{tpu_custom_call.1} parent=1 // pred_check_branch
      %25 = sbr.rel (0) target = $region9
    $region8: #{tpu_custom_call.1} parent=1 // pred_region
      _
    $region9: #{tpu_custom_call.1} parent=1 // pred_fallthru
      _
    // Predicated region
    $region10: #{tpu_custom_call.1} parent=1 // pred_check
      _
    $region11: #{tpu_custom_call.1} parent=1 // pred_check_branch
      %27 = sbr.rel (0) target = $region13
    $region12: #{tpu_custom_call.1} parent=1 // pred_region
      %28 = dma.done [#allocation3], 256
    $region13: #{tpu_custom_call.1} parent=1 // pred_fallthru
      _
    %v29 = vld [vmem:[#allocation2] sm:$0xff]
    %v30 = vld [vmem:[#allocation2 + $0x8] sm:$0xff]
    %v31 = vld [vmem:[%s1] sm:$0x1]
    %v33 = vlaneseq
    %v34 = vshrl.u32 %v33, 7
    %v35 = vsub.s32 0, %v34
    %v36 = vrot.slane %v31, %v35
    %v38 = vmul.f32 %v29, %v36
    %v39 = vmul.f32 %v30, %v36
    %vm40 = vcmask 261120
    %v41 = vsel %vm40, %v38, 0.0
    %42 = vadd.xlane.f32.xlu0 %v41
    %v43 = vpop.xlane.xlu0 %42
    %v44 = vsel %vm40, %v39, 0.0
    %45 = vadd.xlane.f32.xlu0 %v44
    %v46 = vpop.xlane.xlu0 %45
    %v49 = vlaneseq
    %v50 = vand.u32 %v49, 127
    %v51 = vlaneseq
    %v52 = vshrl.u32 %v51, 7
    %v53 = vsub.s32 %v50, %v52
    %v54 = vrot.slane %v43, %v53
    %v55 = vlaneseq
    %v56 = vshrl.u32 %v55, 7
    %v57 = vsub.s32 %v50, %v56
    %v58 = vrot.slane %v46, %v57
    %vm59 = vcmask 1041409
    %v60 = vsel %vm59, %v58, %v54
    %vm62 = vcmask 58368
    %v63 = vsel %vm62, %v60, -inf
    %64 = vmax.xlane.f32.xlu0 %v63
    %v65 = vpop.xlane.xlu0 %64
    %v67 = vlaneseq
    %v68 = vshrl.u32 %v67, 7
    %v69 = vsub.s32 0, %v68
    %v70 = vrot.slane %v65, %v69
    %v71 = vlaneseq
    %v72 = vshrl.u32 %v71, 7
    %v73 = vsub.s32 1, %v72
    %v74 = vrot.slane %v65, %v73
    %v77 = vsub.f32 %v43, %v70
    %v78 = vsub.f32 %v46, %v74
    %v79 = vmul.f32 %v77, 1.442695
    %v80 = vpow.pop %v79
    %v81 = vmul.f32 %v78, 1.442695
    %v82 = vpow.pop %v81
    %85 = vset.pattern.permute.xlu0 0
    %86 = vperm.xlu0 %85, %v80
    %v87 = vpop.permute.xlu0 %86
    %88 = vset.pattern.permute.xlu0 0
    %89 = vperm.xlu0 %88, %v82
    %v90 = vpop.permute.xlu0 %89
    %v91 = vlaneseq
    %v92 = vshrl.u32 %v91, 7
    %v93 = vsub.s32 %v50, %v92
    %v94 = vrot.slane %v87, %v93
    %v95 = vlaneseq
    %v96 = vshrl.u32 %v95, 7
    %v97 = vsub.s32 %v50, %v96
    %v98 = vrot.slane %v90, %v97
    %v99 = vsel %vm59, %v98, %v94
    %v101 = vsel %vm62, %v99, 0.0
    %102 = vadd.xlane.f32.xlu0 %v101
    %v103 = vpop.xlane.xlu0 %102
    %v104 = vrcp.pop %v103
    %v105 = vmul.f32 %v103, %v104
    %v106 = vsub.f32 2.0, %v105
    %v107 = vmul.f32 %v104, %v106
    %v109 = vlaneseq
    %v110 = vshrl.u32 %v109, 7
    %v111 = vsub.s32 0, %v110
    %v112 = vrot.slane %v107, %v111
    %v113 = vlaneseq
    %v114 = vshrl.u32 %v113, 7
    %v115 = vsub.s32 1, %v114
    %v116 = vrot.slane %v107, %v115
    %v119 = vmul.f32 %v80, %v112
    %v120 = vmul.f32 %v82, %v116
    %123 = vset.pattern.permute.xlu0 0
    %124 = vperm.xlu0 %123, %v119
    %v125 = vpop.permute.xlu0 %124
    %126 = vset.pattern.permute.xlu0 0
    %127 = vperm.xlu0 %126, %v120
    %v128 = vpop.permute.xlu0 %127
    %v129 = vlaneseq
    %v130 = vshrl.u32 %v129, 7
    %v131 = vsub.s32 %v50, %v130
    %v132 = vrot.slane %v125, %v131
    %v133 = vlaneseq
    %v134 = vshrl.u32 %v133, 7
    %v135 = vsub.s32 %v50, %v134
    %v136 = vrot.slane %v128, %v135
    %v137 = vsel %vm59, %v136, %v132
    %139 = vst.msk [vmem:[#allocation6] sm:$0x3] %vm62, %v137
    %v142 = vmul.f32 %v125, %v29
    %v143 = vmul.f32 %v128, %v30
    %v144 = vsel %vm40, %v142, 0.0
    %v145 = vrot.slane %v144, 4
    %v146 = vadd.f32 %v144, %v145
    %v147 = vrot.slane %v146, 2
    %v148 = vadd.f32 %v146, %v147
    %v149 = vrot.slane %v148, 1
    %v150 = vadd.f32 %v148, %v149
    %v151 = vsel %vm40, %v143, 0.0
    %v152 = vrot.slane %v151, 4
    %v153 = vadd.f32 %v151, %v152
    %v154 = vrot.slane %v153, 2
    %v155 = vadd.f32 %v153, %v154
    %v156 = vrot.slane %v155, 1
    %v157 = vadd.f32 %v155, %v156
    %v160 = vsel %vm59, %v157, %v150
    %vm162 = vcmask 254976
    %163 = vst.msk [vmem:[#allocation5] sm:$0x3] %vm162, %v160
    // Predicated region
    $region14: #{tpu_custom_call.1} parent=1 // pred_check
      _
    $region15: #{tpu_custom_call.1} parent=1 // pred_check_branch
      %165 = sbr.rel (0) target = $region17
    $region16: #{tpu_custom_call.1} parent=1 // pred_region
      %s167 = ssub.s32 32, 32
      %168 = vsyncadd [#allocation4], %s167
      %s170 = sshll.u32 [#allocation5], 4
      %s171 = int_to_ptr.vmem [resolvable:$true] %s170
      %173 = dma.vmem_to_hbm [thread:$0]  %s171, 32, %s2, [#allocation4]
    $region17: #{tpu_custom_call.1} parent=1 // pred_fallthru
      _
    // Predicated region
    $region18: #{tpu_custom_call.1} parent=1 // pred_check
      _
    $region19: #{tpu_custom_call.1} parent=1 // pred_check_branch
      %175 = sbr.rel (0) target = $region21
    $region20: #{tpu_custom_call.1} parent=1 // pred_region
      %s177 = ssub.s32 32, 32
      %178 = vsyncadd [#allocation7], %s177
      %s180 = sshll.u32 [#allocation6], 4
      %s181 = int_to_ptr.vmem [resolvable:$true] %s180
      %183 = dma.vmem_to_hbm [thread:$0]  %s181, 32, %s3, [#allocation7]
    $region21: #{tpu_custom_call.1} parent=1 // pred_fallthru
      _
    // Predicated region
    $region22: #{tpu_custom_call.1} parent=1 // pred_check
      _
    $region23: #{tpu_custom_call.1} parent=1 // pred_check_branch
      %185 = sbr.rel (0) target = $region25
    $region24: #{tpu_custom_call.1} parent=1 // pred_region
      %186 = dma.done [#allocation4], 32
    $region25: #{tpu_custom_call.1} parent=1 // pred_fallthru
      _
    // Predicated region
    $region26: #{tpu_custom_call.1} parent=1 // pred_check
      _
    $region27: #{tpu_custom_call.1} parent=1 // pred_check_branch
      %188 = sbr.rel (0) target = $region29
    $region28: #{tpu_custom_call.1} parent=1 // pred_region
      %189 = dma.done [#allocation7], 32
    $region29: #{tpu_custom_call.1} parent=1 // pred_fallthru
      _
    %190 = vsyncpa [#allocation3], 1
    %191 = vsyncpa [#allocation4], 1
    %192 = vsyncpa [#allocation7], 1

</llo_original>
